<compile_context>
chip_gen: v7x
topology: tpu7x:2x2x1
jax: 0.10.0
libtpu: 0.0.40
codegen_flags: <defaults>
</compile_context>

<pallas_src>
import math

import jax
import jax.numpy as jnp
from jax.experimental import pallas as pl
from jax.experimental.pallas import tpu as pltpu


def _rope_kernel(rows_ref, out_ref):
    """Write one (TR, LANE_W) lane-dense tile of the packed frequency table.

    rows_ref: (2, LANE_W) float32 resident helper rows
        rows_ref[0, q*F + c] = pack * inv_freq[c]          (per-lane multiplier)
        rows_ref[1, q*F + c] = q * inv_freq[c]             (per-lane additive term)
    Packed row r, lane q*F + c holds (r*pack + q) * inv_freq[c].
    """
    tr, lw = out_ref.shape
    mul_row = rows_ref[0:1, :]                                   # (1, LW)
    base_f = (pl.program_id(0) * tr).astype(jnp.float32)         # tile row offset
    add_row = rows_ref[1:2, :] + base_f * mul_row                # folded once per tile
    # int32 iota + convert (safe lowering); 2 VALU ops + 1 FMA-able mul/add per vreg.
    row = jax.lax.broadcasted_iota(jnp.int32, (tr, lw), 0).astype(jnp.float32)
    out_ref[...] = row * mul_row + add_row


def make_inv_freq(channel: int, dim: int = 3, theta: float = 10000.0) -> jnp.ndarray:
    # Deterministic buffer construction, matches nn.Module __init__.
    idx = jnp.arange(0, channel // dim, 2, dtype=jnp.float32)
    return 1.0 / (theta ** (idx / channel))


def _choose_tiling(n_packed: int, lane_w: int, *, tile_bytes: int, split_bytes: int):
    """Pick (tile_rows, grid_len) from a per-buffer byte budget."""
    row_bytes = lane_w * 4
    tr_cap = max(8, (tile_bytes // row_bytes) // 8 * 8)          # rows per tile, cap by bytes
    total_bytes = n_packed * row_bytes
    if n_packed < 16 or (n_packed <= tr_cap and total_bytes <= split_bytes):
        # Tiny table: single block (block shape == full array dim is always legal).
        return n_packed, 1
    # Large table: >= 2 balanced steps (lets v7x shard the "parallel" axis over 2 TCs),
    # each a multiple of 8 rows and within the byte budget.
    num_steps = max(2, pl.cdiv(n_packed, tr_cap))
    tr = min(tr_cap, ((pl.cdiv(n_packed, num_steps) + 7) // 8) * 8)
    return tr, pl.cdiv(n_packed, tr)


def rope_table_packed(seqlen: int, inv_freq: jnp.ndarray, *,
                      tile_bytes: int = 4 << 20, split_bytes: int = 512 << 10):
    """Lane-dense packed frequency table.

    Returns (table, pack) where table has shape (ceil(seqlen/pack), pack*F); packed row r,
    lane q*F + c holds (r*pack + q) * inv_freq[c].  Consumers should index this layout
    directly (or fuse) instead of reshaping to (seqlen, F).
    """
    f = int(inv_freq.shape[0])
    pack = 128 // math.gcd(f, 128)           # power of two; lane_w = lcm(F, 128)
    lane_w = f * pack
    n_packed = pl.cdiv(seqlen, pack)

    # Pre-multiplied helper rows, stacked into one small resident input buffer.
    inv32 = inv_freq.astype(jnp.float32)
    inv_tiled = jnp.tile(inv32, pack)                                     # (lane_w,)
    lane_off = jnp.repeat(jnp.arange(pack, dtype=jnp.float32), f)         # (lane_w,)
    rows = jnp.stack([jnp.float32(pack) * inv_tiled, lane_off * inv_tiled], axis=0)

    tr, grid_len = _choose_tiling(n_packed, lane_w,
                                  tile_bytes=tile_bytes, split_bytes=split_bytes)

    table = pl.pallas_call(
        _rope_kernel,
        out_shape=jax.ShapeDtypeStruct((n_packed, lane_w), jnp.float32),
        grid=(grid_len,),
        in_specs=[pl.BlockSpec((2, lane_w), lambda i: (0, 0))],           # resident helper rows
        out_specs=pl.BlockSpec((tr, lane_w), lambda i: (i, 0)),
        compiler_params=pltpu.CompilerParams(
            dimension_semantics=("parallel",),                            # shard over v7x TCs
        ),
    )(rows)
    return table, pack


def rope_forward(seqlen: int, inv_freq: jnp.ndarray, **kw) -> jnp.ndarray:
    """Module-equivalent forward: outer(arange(seqlen), inv_freq) -> (seqlen, F)."""
    f = int(inv_freq.shape[0])
    table, pack = rope_table_packed(seqlen, inv_freq, **kw)
    n_packed = table.shape[0]
    # NOTE: this reshape is a TPU relayout (minor dim 128 -> F) with an extra HBM round
    # trip; prefer consuming rope_table_packed() output directly when possible.
    # TODO(synk): fuse into the RoPE-apply consumer and drop this unpacked view entirely.
    return table.reshape(n_packed * pack, f)[:seqlen]


if __name__ == "__main__":
    # Small shapes consistent with the module: channel=96, dim=3 -> 16 freqs.
    channel, dim, theta = 96, 3, 10000.0
    _ = jax.random.PRNGKey(0)   # ROPE has no random parameters; key kept for convention.

    inv_freq = make_inv_freq(channel, dim, theta)

    # seqlen=256: single-block fast path; seqlen=77: tail/padding path;
    # seqlen=10000: >512 KiB table -> balanced 2-step "parallel" grid path.
    for seqlen in (256, 77, 10000):
        freqs = jax.block_until_ready(rope_forward(seqlen, inv_freq))
        ref = jnp.outer(jnp.arange(seqlen, dtype=jnp.float32), inv_freq)
        assert freqs.shape == (seqlen, inv_freq.shape[0]), (seqlen, freqs.shape)
        assert jnp.allclose(freqs, ref, rtol=1e-6, atol=1e-6), seqlen

    print("KERNEL_OK")
</pallas_src>

<mosaic_0001>
module attributes {stable_mosaic.version = 11 : i64} {
  func.func @_rope_kernel(%arg0: i32, %arg1: memref<2x128xf32, #tpu.memory_space<vmem>>, %arg2: memref<32x128xf32, #tpu.memory_space<vmem>>) attributes {dimension_semantics = [#tpu.dimension_semantics<parallel>], iteration_bounds = array<i64: 1>, scalar_prefetch = 0 : i64, scratch_operands = 0 : i64, tpu.core_type = #tpu.core_type<tc>, window_params = [{pipeline_mode = #tpu.pipeline_mode<synchronous>, transform_indices = @transform_0, window_bounds = array<i64: 2, 128>}, {transform_indices = @transform_1, window_bounds = array<i64: 32, 128>}]} {
    %c0 = arith.constant 0 : index
    %c0_0 = arith.constant 0 : index
    %0 = vector.load %arg1[%c0, %c0_0] : memref<2x128xf32, #tpu.memory_space<vmem>>, vector<1x128xf32>
    %c32_i32 = arith.constant 32 : i32
    %1 = arith.muli %arg0, %c32_i32 : i32
    %2 = arith.sitofp %1 : i32 to f32
    %c1 = arith.constant 1 : index
    %c0_1 = arith.constant 0 : index
    %3 = vector.load %arg1[%c1, %c0_1] : memref<2x128xf32, #tpu.memory_space<vmem>>, vector<1x128xf32>
    %4 = vector.broadcast %2 : f32 to vector<1x128xf32>
    %5 = arith.mulf %4, %0 : vector<1x128xf32>
    %6 = arith.addf %3, %5 : vector<1x128xf32>
    %7 = tpu.iota {dimensions = array<i32: 0>} : vector<32x128xi32>
    %8 = arith.sitofp %7 : vector<32x128xi32> to vector<32x128xf32>
    %9 = vector.broadcast %0 : vector<1x128xf32> to vector<32x128xf32>
    %10 = arith.mulf %8, %9 : vector<32x128xf32>
    %11 = vector.broadcast %6 : vector<1x128xf32> to vector<32x128xf32>
    %12 = arith.addf %10, %11 : vector<32x128xf32>
    %c0_2 = arith.constant 0 : index
    %c0_3 = arith.constant 0 : index
    %13 = vector.load %arg2[%c0_2, %c0_3] : memref<32x128xf32, #tpu.memory_space<vmem>>, vector<32x128xf32>
    tpu.vector_store %arg2[%c0_2, %c0_3], %12 {strides = array<i32>} : memref<32x128xf32, #tpu.memory_space<vmem>>, vector<32x128xf32>,
    return
  }
  func.func @transform_0(%arg0: i32) -> (i32, i32) {
    %c0_i32 = arith.constant 0 : i32
    %c0_i32_0 = arith.constant 0 : i32
    %c0_i32_1 = arith.constant 0 : i32
    return %c0_i32, %c0_i32_0 : i32, i32
  }
  func.func @transform_1(%arg0: i32) -> (i32, i32) {
    %c0_i32 = arith.constant 0 : i32
    %c0_i32_0 = arith.constant 0 : i32
    return %arg0, %c0_i32 : i32, i32
  }
}

</mosaic_0001>

<llo_original>
// kernel: tpu_custom_call.1
$region0: #{tpu_custom_call.1}
  #allocation0 [shape = 'u32[]', space=smem, size = 0x4, offset = 0x4, fixed_abs, tag = 'smem constant byte address 0x4 - core index']
  #allocation1 [shape = 'u32[144,128]{1,0:T(1,128)}', space=vmem, size = 0x12000, scoped, tag = 'internal scratch']
  %s0 = inlined_call_operand.hbm [shape: f32[2,128], index: 0, kind: input, shape index: {}]
  %s1 = inlined_call_operand.hbm [shape: f32[32,128], index: 1, kind: output, shape index: {}]
  %s2 = sld [smem:[#allocation0]]
  $region18: #{tpu_custom_call.1} parent=0
    _
  %s4 = ssub.s32 1, %s2
  %s5 = scalar_select 0, %s4, %s2
  $region1: #{tpu_custom_call.1} parent=0
    #allocation2 [shape = 'u8[1024]{0}', space=vmem, size = 0x400, scoped, tag = 'input window, operand 0, single buffered']
    #allocation3 [shape = 's32[1]{0}', space=sflag, size = 0x4, scoped, tag = 'scoped memory for tpu_custom_call.1']
    #allocation4 [shape = 's32[1]{0}', space=sflag, size = 0x4, scoped, tag = 'scoped memory for tpu_custom_call.1']
    #allocation5 [shape = 'u8[16384]{0}', space=vmem, size = 0x4000, scoped, tag = 'output window, operand 0, single buffered']
    %6 = vsyncpa [#allocation3], 0
    %7 = vsyncpa [#allocation4], 0
    // Predicated region
    $region2: #{tpu_custom_call.1} parent=1 // pred_check
      _
    $region3: #{tpu_custom_call.1} parent=1 // pred_check_branch
      %9 = sbr.rel (0) target = $region5
    $region4: #{tpu_custom_call.1} parent=1 // pred_region
      %s11 = ssub.s32 32, 32
      %12 = vsyncadd [#allocation3], %s11
      %s14 = sshll.u32 [#allocation2], 4
      %s15 = int_to_ptr.vmem [resolvable:$true] %s14
      %17 = dma.hbm_to_vmem [thread:$0]  %s0, 32, %s15, [#allocation3]
    $region5: #{tpu_custom_call.1} parent=1 // pred_fallthru
      _
    // Predicated region
    $region6: #{tpu_custom_call.1} parent=1 // pred_check
      _
    $region7: #{tpu_custom_call.1} parent=1 // pred_check_branch
      %19 = sbr.rel (0) target = $region9
    $region8: #{tpu_custom_call.1} parent=1 // pred_region
      %20 = dma.done [#allocation3], 32
    $region9: #{tpu_custom_call.1} parent=1 // pred_fallthru
      _
    %v21 = vld [vmem:[#allocation2] sm:$0x1]
    %s22 = smul.u32 0, 32
    %s23 = scvt.s32.f32 %s22
    %v24 = vld [vmem:[#allocation2 + $0x1] sm:$0x1]
    %v25 = vstv %s23
    %v26 = vmul.f32 %v25, %v21
    %v27 = vadd.f32 %v24, %v26
    %v28 = vlaneseq
    %v29 = vshrl.u32 %v28, 7
    %v30 = vadd.s32 %v29, 8
    %v31 = vadd.s32 %v29, 16
    %v32 = vadd.s32 %v29, 24
    %v33 = vcvt.s32.f32 %v29
    %v34 = vcvt.s32.f32 %v30
    %v35 = vcvt.s32.f32 %v31
    %v36 = vcvt.s32.f32 %v32
    %v37 = vlaneseq
    %v38 = vshrl.u32 %v37, 7
    %v39 = vsub.s32 0, %v38
    %v40 = vrot.slane %v21, %v39
    %v41 = vmul.f32 %v33, %v40
    %v42 = vmul.f32 %v34, %v40
    %v43 = vmul.f32 %v35, %v40
    %v44 = vmul.f32 %v36, %v40
    %v45 = vlaneseq
    %v46 = vshrl.u32 %v45, 7
    %v47 = vsub.s32 0, %v46
    %v48 = vrot.slane %v27, %v47
    %v49 = vadd.f32 %v41, %v48
    %v50 = vadd.f32 %v42, %v48
    %v51 = vadd.f32 %v43, %v48
    %v52 = vadd.f32 %v44, %v48
    %53 = vst [vmem:[#allocation5] sm:$0xff] %v49
    %54 = vst [vmem:[#allocation5 + $0x8] sm:$0xff] %v50
    %55 = vst [vmem:[#allocation5 + $0x10] sm:$0xff] %v51
    %56 = vst [vmem:[#allocation5 + $0x18] sm:$0xff] %v52
    // Predicated region
    $region10: #{tpu_custom_call.1} parent=1 // pred_check
      _
    $region11: #{tpu_custom_call.1} parent=1 // pred_check_branch
      %58 = sbr.rel (0) target = $region13
    $region12: #{tpu_custom_call.1} parent=1 // pred_region
      %s60 = ssub.s32 512, 512
      %61 = vsyncadd [#allocation4], %s60
      %s62 = sshll.u32 [#allocation5], 4
      %s63 = int_to_ptr.vmem [resolvable:$true] %s62
      %68 = dma.vmem_to_hbm [thread:$0]  %s63, 512, %s1, [#allocation4], 128, 128, 8
    $region13: #{tpu_custom_call.1} parent=1 // pred_fallthru
      _
    // Predicated region
    $region14: #{tpu_custom_call.1} parent=1 // pred_check
      _
    $region15: #{tpu_custom_call.1} parent=1 // pred_check_branch
      %70 = sbr.rel (0) target = $region17
    $region16: #{tpu_custom_call.1} parent=1 // pred_region
      %71 = dma.done [#allocation4], 512
    $region17: #{tpu_custom_call.1} parent=1 // pred_fallthru
      _
    %72 = vsyncpa [#allocation3], 1
    %73 = vsyncpa [#allocation4], 1

</llo_original>
